<compile_context>
chip_gen: v7x
topology: tpu7x:2x2x1
jax: 0.10.0
libtpu: 0.0.40
codegen_flags: <defaults>
</compile_context>

<pallas_src>
import numpy as np
import jax
import jax.numpy as jnp
from jax.experimental import pallas as pl
from jax.experimental.pallas import tpu as pltpu


# ----------------------------------------------------------------------------
# Shape-dependent constant operators (built in numpy, passed as kernel inputs)
# ----------------------------------------------------------------------------
def _adaptive_avg_pool_matrix(h, w, s):
    """(s*s, h*w) matrix implementing nn.AdaptiveAvgPool2d((s, s)) on an (h, w) map."""
    P = np.zeros((s * s, h * w), dtype=np.float32)
    for i in range(s):
        h0 = (i * h) // s
        h1 = -((-(i + 1) * h) // s)  # ceil((i+1)*h/s)
        for j in range(s):
            w0 = (j * w) // s
            w1 = -((-(j + 1) * w) // s)
            cnt = (h1 - h0) * (w1 - w0)
            for y in range(h0, h1):
                for x in range(w0, w1):
                    P[i * s + j, y * w + x] = 1.0 / cnt
    return P


def _bilinear_upsample_matrix(h, w, s):
    """(h*w, s*s) matrix: bilinear upsample (s, s) -> (h, w) with align_corners=True."""
    def axis_mat(dst, src):
        U = np.zeros((dst, src), dtype=np.float32)
        for d in range(dst):
            if src == 1 or dst == 1:
                U[d, 0] = 1.0
                continue
            c = d * (src - 1) / (dst - 1)
            i0 = int(np.floor(c))
            i1 = min(i0 + 1, src - 1)
            t = c - i0
            U[d, i0] += 1.0 - t
            U[d, i1] += t
        return U

    Uh = axis_mat(h, s)  # (h, s)
    Uw = axis_mat(w, s)  # (w, s)
    return np.einsum('yi,xj->yxij', Uh, Uw).reshape(h * w, s * s).astype(np.float32)


def _fused_operators(h, w, sizes, ss_pad):
    """Fused pooling operator P_T (HW, ss_pad) and upsample operator U_T (ss_pad, HW)."""
    P = np.concatenate([_adaptive_avg_pool_matrix(h, w, s) for s in sizes], axis=0)
    U = np.concatenate([_bilinear_upsample_matrix(h, w, s) for s in sizes], axis=1)
    ss_total = P.shape[0]
    hw = h * w
    P_T = np.zeros((hw, ss_pad), np.float32)
    P_T[:, :ss_total] = P.T
    U_T = np.zeros((ss_pad, hw), np.float32)
    U_T[:ss_total, :] = U.T
    return P_T, U_T


# ----------------------------------------------------------------------------
# Kernel 1: full-HW path — 5 well-shaped bf16 MXU matmuls + small f32 epilogue,
# one batch element per grid step.  feats read from HBM exactly once.
# ----------------------------------------------------------------------------
def _psp_kernel_full(feats_ref, pt_ref, ut_ref, wall_ref, ball_ref, mask_ref,
                     wbsel_ref, wbf_ref, b2_ref, out_ref):
    feats = feats_ref[0]                                                   # (C_in, HW) bf16

    # (a) all adaptive average pools fused into ONE matmul (contraction over HW)
    pooled = jnp.dot(feats, pt_ref[...],
                     preferred_element_type=jnp.float32)                   # (C_in, SS)

    # (b) all stage 1x1 convs (+ folded BN scale) fused into ONE matmul;
    #     block mask keeps each stage's output rows on its own pooled columns
    z = jnp.dot(wall_ref[...], pooled.astype(jnp.bfloat16),
                preferred_element_type=jnp.float32)                        # (4*C4, SS)
    z = jnp.maximum(z + ball_ref[...], 0.0) * mask_ref[...]                # BN bias + ReLU

    # (c) bottleneck 1x1-conv slices for all stage priors fused into ONE matmul
    zc = jnp.dot(wbsel_ref[...], z.astype(jnp.bfloat16),
                 preferred_element_type=jnp.float32)                       # (C_out, SS)

    # (d) bottleneck conv on raw feats + all bilinear upsamples, one matmul each
    acc = jnp.dot(wbf_ref[...], feats,
                  preferred_element_type=jnp.float32)                      # (C_out, HW)
    acc = acc + jnp.dot(zc.astype(jnp.bfloat16), ut_ref[...],
                        preferred_element_type=jnp.float32)

    # (e) folded bottleneck-BN bias + ReLU (outer ReLU of the module is redundant)
    out_ref[0] = jnp.maximum(acc + b2_ref[...], 0.0).astype(out_ref.dtype)


# ----------------------------------------------------------------------------
# Kernel 2: spatially-tiled two-phase path for large HW.
#   phase 0 (p == 0): accumulate pooled = sum_j feats_tile_j @ P_T_tile_j;
#                     on the last tile compute zc (C_out, ss_pad).
#   phase 1 (p == 1): out_tile_j = ReLU(wbf @ feats_tile_j + zc @ U_T_tile_j + b2)
# ----------------------------------------------------------------------------
def _psp_kernel_tiled(feats_ref, pt_ref, ut_ref, wall_ref, ball_ref, mask_ref,
                      wbsel_ref, wbf_ref, b2_ref, out_ref,
                      pooled_acc, zc_scratch):
    p = pl.program_id(1)
    j = pl.program_id(2)
    nT = pl.num_programs(2)

    @pl.when((p == 0) & (j == 0))
    def _():
        pooled_acc[...] = jnp.zeros_like(pooled_acc)

    @pl.when(p == 0)
    def _():
        pooled_acc[...] += jnp.dot(feats_ref[0], pt_ref[...],
                                   preferred_element_type=jnp.float32)     # (C_in, SS)

    @pl.when((p == 0) & (j == nT - 1))
    def _():
        z = jnp.dot(wall_ref[...], pooled_acc[...].astype(jnp.bfloat16),
                    preferred_element_type=jnp.float32)                    # (4*C4, SS)
        z = jnp.maximum(z + ball_ref[...], 0.0) * mask_ref[...]
        zc = jnp.dot(wbsel_ref[...], z.astype(jnp.bfloat16),
                     preferred_element_type=jnp.float32)                   # (C_out, SS)
        zc_scratch[...] = zc.astype(jnp.bfloat16)

    @pl.when(p == 1)
    def _():
        acc = jnp.dot(wbf_ref[...], feats_ref[0],
                      preferred_element_type=jnp.float32)                  # (C_out, hw_t)
        acc = acc + jnp.dot(zc_scratch[...], ut_ref[...],
                            preferred_element_type=jnp.float32)
        out_ref[0] = jnp.maximum(acc + b2_ref[...], 0.0).astype(out_ref.dtype)


# ----------------------------------------------------------------------------
# Wrapper (layout, parameter folding, BlockSpecs, path selection)
# ----------------------------------------------------------------------------
def _const_spec(arr, grid_rank):
    zeros = (0,) * arr.ndim
    if grid_rank == 1:
        return pl.BlockSpec(arr.shape, lambda n, _z=zeros: _z)
    return pl.BlockSpec(arr.shape, lambda n, p, j, _z=zeros: _z)


def _pick_hw_tile(HW, cap=2048):
    """Largest multiple of 128 that divides HW (<= cap), or None."""
    best = None
    t = 128
    while t <= min(HW, cap):
        if HW % t == 0:
            best = t
        t += 128
    return best


def psp_forward(feats_nchw, params, sizes=(1, 2, 3, 6), *,
                hw_tile=None, force_tiled=False):
    N, C_in, H, W = feats_nchw.shape
    n_stage = len(sizes)
    C4 = C_in // 4
    C_out = params['wb'].shape[0]
    HW = H * W
    eps = 1e-5

    ss_total = sum(s * s for s in sizes)
    ss_pad = 1 << (max(ss_total, 8) - 1).bit_length()       # e.g. 50 -> 64

    # channels-first, flattened spatial: free reshape (no transpose), bf16 matmul operand
    feats = feats_nchw.reshape(N, C_in, HW).astype(jnp.bfloat16)

    # fused pool / upsample operators (constants)
    P_T_np, U_T_np = _fused_operators(H, W, sizes, ss_pad)
    p_t = jnp.asarray(P_T_np, dtype=jnp.bfloat16)            # (HW, ss_pad)
    u_t = jnp.asarray(U_T_np, dtype=jnp.bfloat16)            # (ss_pad, HW)

    # stage conv weights with BN scale folded, stacked into one operator
    w_blocks, b_blocks = [], []
    for k in range(n_stage):
        g, b, m, v = params['stage_bn'][k]
        sc = g / jnp.sqrt(v + eps)                            # (C4,)
        w_blocks.append(params['stage_w'][k].T * sc[:, None])  # (C4, C_in)
        b_blocks.append((b - m * sc)[:, None])                 # (C4, 1)
    w_all = jnp.concatenate(w_blocks, axis=0).astype(jnp.bfloat16)   # (n_stage*C4, C_in)
    b_all = jnp.concatenate(b_blocks, axis=0).astype(jnp.float32)    # (n_stage*C4, 1)

    # block mask: stage-k rows active only on stage-k pooled columns
    mask_np = np.zeros((n_stage * C4, ss_pad), np.float32)
    off = 0
    for k, s in enumerate(sizes):
        mask_np[k * C4:(k + 1) * C4, off:off + s * s] = 1.0
        off += s * s
    mask = jnp.asarray(mask_np)

    # bottleneck conv with BN scale folded, split into stage-channels / raw-feats parts
    g2, b2v, m2, v2 = params['bn2']
    sc2 = g2 / jnp.sqrt(v2 + eps)                             # (C_out,)
    wb_scaled = params['wb'] * sc2[:, None]                   # (C_out, n_stage*C4 + C_in)
    wbs_sel = wb_scaled[:, :n_stage * C4].astype(jnp.bfloat16)   # (C_out, n_stage*C4)
    wbf = wb_scaled[:, n_stage * C4:].astype(jnp.bfloat16)       # (C_out, C_in)
    bias2 = (b2v - m2 * sc2)[:, None].astype(jnp.float32)        # (C_out, 1)

    consts = [w_all, b_all, mask, wbs_sel, wbf, bias2]
    const_bytes = sum(int(np.prod(a.shape)) * a.dtype.itemsize
                      for a in consts + [p_t, u_t])

    # ---- path selection ---------------------------------------------------
    # Full-HW working set: feats block + out block (double-buffered) + constants.
    full_need = (2 * C_in * HW * 2 + 2 * C_out * HW * 4 + const_bytes
                 + C_in * ss_pad * 4 + (2 << 20))
    if hw_tile is None and (force_tiled or full_need > 28 * (1 << 20)):
        hw_tile = _pick_hw_tile(HW)
    use_tiled = hw_tile is not None
    if use_tiled:
        assert HW % hw_tile == 0 and hw_tile % 128 == 0, (HW, hw_tile)

    inputs = [feats, p_t, u_t] + consts

    if not use_tiled:
        # -------- full-HW path: feats read once per batch element ----------
        in_specs = [pl.BlockSpec((1, C_in, HW), lambda n: (n, 0, 0))] + \
                   [_const_spec(a, 1) for a in inputs[1:]]
        vmem_limit = None
        if full_need > 30 * (1 << 20):
            vmem_limit = int(min(full_need + (4 << 20), 60 * (1 << 20)))
        out = pl.pallas_call(
            _psp_kernel_full,
            out_shape=jax.ShapeDtypeStruct((N, C_out, HW), jnp.float32),
            grid=(N,),
            in_specs=in_specs,
            out_specs=pl.BlockSpec((1, C_out, HW), lambda n: (n, 0, 0)),
            compiler_params=pltpu.CompilerParams(
                dimension_semantics=("parallel",),
                vmem_limit_bytes=vmem_limit),
        )(*inputs)
    else:
        # -------- spatially-tiled two-phase path ---------------------------
        T = HW // hw_tile
        in_specs = [
            pl.BlockSpec((1, C_in, hw_tile), lambda n, p, j: (n, 0, j)),
            pl.BlockSpec((hw_tile, ss_pad), lambda n, p, j: (j, 0)),
            pl.BlockSpec((ss_pad, hw_tile), lambda n, p, j: (0, j)),
        ] + [_const_spec(a, 3) for a in consts]
        # Output block stays resident on tile 0 through phase 0 (index p*j == 0),
        # so no garbage writeback ever happens; phase 1 writes each tile once.
        out_spec = pl.BlockSpec((1, C_out, hw_tile), lambda n, p, j: (n, 0, p * j))

        tiled_need = (2 * C_in * hw_tile * 2          # feats tile (bf16), double-buffered
                      + 2 * C_out * hw_tile * 4       # out tile (f32), double-buffered
                      + 4 * hw_tile * ss_pad * 2      # P_T / U_T tiles, double-buffered
                      + const_bytes
                      + C_in * ss_pad * 4 + C_out * ss_pad * 2
                      + (2 << 20))
        vmem_limit = None
        if tiled_need > 30 * (1 << 20):
            vmem_limit = int(min(tiled_need + (4 << 20), 60 * (1 << 20)))

        out = pl.pallas_call(
            _psp_kernel_tiled,
            out_shape=jax.ShapeDtypeStruct((N, C_out, HW), jnp.float32),
            grid=(N, 2, T),
            in_specs=in_specs,
            out_specs=out_spec,
            scratch_shapes=[pltpu.VMEM((C_in, ss_pad), jnp.float32),
                            pltpu.VMEM((C_out, ss_pad), jnp.bfloat16)],
            compiler_params=pltpu.CompilerParams(
                dimension_semantics=("parallel", "arbitrary", "arbitrary"),
                vmem_limit_bytes=vmem_limit),
        )(*inputs)

    return out.reshape(N, C_out, H, W)      # free reshape back to NCHW


# ----------------------------------------------------------------------------
# Pure-JAX reference (mirrors PyTorch forward semantics) for verification
# ----------------------------------------------------------------------------
def psp_reference(feats_nchw, params, sizes=(1, 2, 3, 6)):
    N, C_in, H, W = feats_nchw.shape
    eps = 1e-5
    x = jnp.transpose(feats_nchw, (0, 2, 3, 1)).reshape(N, H * W, C_in)
    priors = []
    for k, s in enumerate(sizes):
        P = jnp.asarray(_adaptive_avg_pool_matrix(H, W, s))
        U = jnp.asarray(_bilinear_upsample_matrix(H, W, s))
        pooled = jnp.einsum('ph,nhc->npc', P, x)
        z = pooled @ params['stage_w'][k]
        gamma, beta, mean, var = params['stage_bn'][k]
        z = (z - mean) / jnp.sqrt(var + eps) * gamma + beta
        z = jax.nn.relu(z)
        priors.append(jnp.einsum('qp,npc->nqc', U, z))
    priors.append(x)
    cat = jnp.concatenate(priors, axis=-1)                      # (N, HW, 2*C_in)
    y = cat @ params['wb'].T
    gamma2, beta2, mean2, var2 = params['bn2']
    y = (y - mean2) / jnp.sqrt(var2 + eps) * gamma2 + beta2
    y = jax.nn.relu(y)
    return y.reshape(N, H, W, -1).transpose(0, 3, 1, 2)


# ----------------------------------------------------------------------------
def _make_params(key, C_in, C_out, n_stage):
    C4 = C_in // 4
    ks = jax.random.split(key, 4 * n_stage + 5)
    stage_w, stage_bn = [], []
    for k in range(n_stage):
        stage_w.append(0.1 * jax.random.normal(ks[4 * k], (C_in, C4), jnp.float32))
        g = jax.random.uniform(ks[4 * k + 1], (C4,), minval=0.5, maxval=1.5)
        b = 0.1 * jax.random.normal(ks[4 * k + 2], (C4,), dtype=jnp.float32)
        m = 0.1 * jax.random.normal(ks[4 * k + 3], (C4,), dtype=jnp.float32)
        v = jax.random.uniform(jax.random.fold_in(ks[4 * k + 1], 7), (C4,),
                               minval=0.5, maxval=1.5)
        stage_bn.append((g, b, m, v))
    wb = 0.1 * jax.random.normal(ks[-5], (C_out, 2 * C_in), jnp.float32)
    bn2 = (jax.random.uniform(ks[-4], (C_out,), minval=0.5, maxval=1.5),
           0.1 * jax.random.normal(ks[-3], (C_out,), dtype=jnp.float32),
           0.1 * jax.random.normal(ks[-2], (C_out,), dtype=jnp.float32),
           jax.random.uniform(ks[-1], (C_out,), minval=0.5, maxval=1.5))
    return {'stage_w': stage_w, 'stage_bn': stage_bn, 'wb': wb, 'bn2': bn2}


def _run_case(key, N, C_in, H, W, C_out, sizes, **kw):
    kx, kp = jax.random.split(key)
    x = jax.random.normal(kx, (N, C_in, H, W), jnp.float32)
    params = _make_params(kp, C_in, C_out, len(sizes))

    out = psp_forward(x, params, sizes, **kw)
    out = jax.block_until_ready(out)

    ref = psp_reference(x, params, sizes)
    assert out.shape == (N, C_out, H, W), out.shape
    err = float(np.max(np.abs(np.asarray(out) - np.asarray(ref))))
    # bf16 matmul operands (f32 accumulation) vs f32 reference -> relaxed tolerance
    assert np.allclose(np.asarray(out), np.asarray(ref), atol=5e-2, rtol=5e-2), err


if __name__ == "__main__":
    sizes = (1, 2, 3, 6)
    key = jax.random.PRNGKey(0)
    k1, k2 = jax.random.split(key)

    # 1) small shape consistent with PSPModule -> full-HW single-phase path
    _run_case(k1, N=2, C_in=16, H=12, W=12, C_out=8, sizes=sizes)

    # 2) HW divisible by 128 with forced tiling -> exercises the two-phase
    #    spatially-tiled path (used for production-size feature maps)
    _run_case(k2, N=2, C_in=16, H=16, W=16, C_out=8, sizes=sizes, hw_tile=128)

    print("KERNEL_OK")
</pallas_src>

<mosaic_0001>
module attributes {stable_mosaic.version = 11 : i64} {
  func.func @_psp_kernel_full(%arg0: i32, %arg1: memref<1x16x144xbf16, #tpu.memory_space<vmem>>, %arg2: memref<144x64xbf16, #tpu.memory_space<vmem>>, %arg3: memref<64x144xbf16, #tpu.memory_space<vmem>>, %arg4: memref<16x16xbf16, #tpu.memory_space<vmem>>, %arg5: memref<16x1xf32, #tpu.memory_space<vmem>>, %arg6: memref<16x64xf32, #tpu.memory_space<vmem>>, %arg7: memref<8x16xbf16, #tpu.memory_space<vmem>>, %arg8: memref<8x16xbf16, #tpu.memory_space<vmem>>, %arg9: memref<8x1xf32, #tpu.memory_space<vmem>>, %arg10: memref<1x8x144xf32, #tpu.memory_space<vmem>>) attributes {dimension_semantics = [#tpu.dimension_semantics<parallel>], iteration_bounds = array<i64: 2>, scalar_prefetch = 0 : i64, scratch_operands = 0 : i64, tpu.core_type = #tpu.core_type<tc>, window_params = [{transform_indices = @transform_0, window_bounds = array<i64: 1, 16, 144>}, {pipeline_mode = #tpu.pipeline_mode<synchronous>, transform_indices = @transform_1, window_bounds = array<i64: 144, 64>}, {pipeline_mode = #tpu.pipeline_mode<synchronous>, transform_indices = @transform_2, window_bounds = array<i64: 64, 144>}, {pipeline_mode = #tpu.pipeline_mode<synchronous>, transform_indices = @transform_3, window_bounds = array<i64: 16, 16>}, {pipeline_mode = #tpu.pipeline_mode<synchronous>, transform_indices = @transform_4, window_bounds = array<i64: 16, 1>}, {pipeline_mode = #tpu.pipeline_mode<synchronous>, transform_indices = @transform_5, window_bounds = array<i64: 16, 64>}, {pipeline_mode = #tpu.pipeline_mode<synchronous>, transform_indices = @transform_6, window_bounds = array<i64: 8, 16>}, {pipeline_mode = #tpu.pipeline_mode<synchronous>, transform_indices = @transform_7, window_bounds = array<i64: 8, 16>}, {pipeline_mode = #tpu.pipeline_mode<synchronous>, transform_indices = @transform_8, window_bounds = array<i64: 8, 1>}, {transform_indices = @transform_9, window_bounds = array<i64: 1, 8, 144>}]} {
    %c0 = arith.constant 0 : index
    %c0_0 = arith.constant 0 : index
    %c0_1 = arith.constant 0 : index
    %0 = vector.load %arg1[%c0, %c0_0, %c0_1] : memref<1x16x144xbf16, #tpu.memory_space<vmem>>, vector<1x16x144xbf16>
    %1 = vector.shape_cast %0 : vector<1x16x144xbf16> to vector<16x144xbf16>
    %c0_2 = arith.constant 0 : index
    %c0_3 = arith.constant 0 : index
    %2 = vector.load %arg2[%c0_2, %c0_3] : memref<144x64xbf16, #tpu.memory_space<vmem>>, vector<144x64xbf16>
    %cst = arith.constant dense<0.000000e+00> : vector<16x64xf32>
    %3 = tpu.matmul %1, %2, %cst {dimension_numbers = #tpu.dot_dimension_numbers<[1], [0], [0], [1], [0, 0, 1, 1], [], []>} : vector<16x144xbf16>, vector<144x64xbf16>, vector<16x64xf32> -> vector<16x64xf32>
    %c0_4 = arith.constant 0 : index
    %c0_5 = arith.constant 0 : index
    %4 = vector.load %arg4[%c0_4, %c0_5] : memref<16x16xbf16, #tpu.memory_space<vmem>>, vector<16x16xbf16>
    %5 = arith.truncf %3 : vector<16x64xf32> to vector<16x64xbf16>
    %cst_6 = arith.constant dense<0.000000e+00> : vector<16x64xf32>
    %6 = tpu.matmul %4, %5, %cst_6 {dimension_numbers = #tpu.dot_dimension_numbers<[1], [0], [0], [1], [0, 0, 1, 1], [], []>} : vector<16x16xbf16>, vector<16x64xbf16>, vector<16x64xf32> -> vector<16x64xf32>
    %c0_7 = arith.constant 0 : index
    %c0_8 = arith.constant 0 : index
    %7 = vector.load %arg5[%c0_7, %c0_8] : memref<16x1xf32, #tpu.memory_space<vmem>>, vector<16x1xf32>
    %8 = vector.broadcast %7 : vector<16x1xf32> to vector<16x64xf32>
    %9 = arith.addf %6, %8 : vector<16x64xf32>
    %cst_9 = arith.constant 0.000000e+00 : f32
    %10 = vector.broadcast %cst_9 : f32 to vector<16x64xf32>
    %11 = arith.maximumf %9, %10 : vector<16x64xf32>
    %c0_10 = arith.constant 0 : index
    %c0_11 = arith.constant 0 : index
    %12 = vector.load %arg6[%c0_10, %c0_11] : memref<16x64xf32, #tpu.memory_space<vmem>>, vector<16x64xf32>
    %13 = arith.mulf %11, %12 : vector<16x64xf32>
    %c0_12 = arith.constant 0 : index
    %c0_13 = arith.constant 0 : index
    %14 = vector.load %arg7[%c0_12, %c0_13] : memref<8x16xbf16, #tpu.memory_space<vmem>>, vector<8x16xbf16>
    %15 = arith.truncf %13 : vector<16x64xf32> to vector<16x64xbf16>
    %cst_14 = arith.constant dense<0.000000e+00> : vector<8x64xf32>
    %16 = tpu.matmul %14, %15, %cst_14 {dimension_numbers = #tpu.dot_dimension_numbers<[1], [0], [0], [1], [0, 0, 1, 1], [], []>} : vector<8x16xbf16>, vector<16x64xbf16>, vector<8x64xf32> -> vector<8x64xf32>
    %c0_15 = arith.constant 0 : index
    %c0_16 = arith.constant 0 : index
    %17 = vector.load %arg8[%c0_15, %c0_16] : memref<8x16xbf16, #tpu.memory_space<vmem>>, vector<8x16xbf16>
    %cst_17 = arith.constant dense<0.000000e+00> : vector<8x144xf32>
    %18 = tpu.matmul %17, %1, %cst_17 {dimension_numbers = #tpu.dot_dimension_numbers<[1], [0], [0], [1], [0, 0, 1, 1], [], []>} : vector<8x16xbf16>, vector<16x144xbf16>, vector<8x144xf32> -> vector<8x144xf32>
    %19 = arith.truncf %16 : vector<8x64xf32> to vector<8x64xbf16>
    %c0_18 = arith.constant 0 : index
    %c0_19 = arith.constant 0 : index
    %20 = vector.load %arg3[%c0_18, %c0_19] : memref<64x144xbf16, #tpu.memory_space<vmem>>, vector<64x144xbf16>
    %cst_20 = arith.constant dense<0.000000e+00> : vector<8x144xf32>
    %21 = tpu.matmul %19, %20, %cst_20 {dimension_numbers = #tpu.dot_dimension_numbers<[1], [0], [0], [1], [0, 0, 1, 1], [], []>} : vector<8x64xbf16>, vector<64x144xbf16>, vector<8x144xf32> -> vector<8x144xf32>
    %22 = arith.addf %18, %21 : vector<8x144xf32>
    %c0_21 = arith.constant 0 : index
    %c0_22 = arith.constant 0 : index
    %23 = vector.load %arg9[%c0_21, %c0_22] : memref<8x1xf32, #tpu.memory_space<vmem>>, vector<8x1xf32>
    %24 = vector.broadcast %23 : vector<8x1xf32> to vector<8x144xf32>
    %25 = arith.addf %22, %24 : vector<8x144xf32>
    %cst_23 = arith.constant 0.000000e+00 : f32
    %26 = vector.broadcast %cst_23 : f32 to vector<8x144xf32>
    %27 = arith.maximumf %25, %26 : vector<8x144xf32>
    %c0_24 = arith.constant 0 : index
    %c0_25 = arith.constant 0 : index
    %c0_26 = arith.constant 0 : index
    %28 = vector.load %arg10[%c0_24, %c0_25, %c0_26] : memref<1x8x144xf32, #tpu.memory_space<vmem>>, vector<1x8x144xf32>
    %29 = vector.shape_cast %28 : vector<1x8x144xf32> to vector<8x144xf32>
    %30 = vector.shape_cast %27 : vector<8x144xf32> to vector<1x8x144xf32>
    tpu.vector_store %arg10[%c0_24, %c0_25, %c0_26], %30 {strides = array<i32>} : memref<1x8x144xf32, #tpu.memory_space<vmem>>, vector<1x8x144xf32>,
    return
  }
  func.func @transform_0(%arg0: i32) -> (i32, i32, i32) {
    %c0_i32 = arith.constant 0 : i32
    %c0_i32_0 = arith.constant 0 : i32
    %c0_i32_1 = arith.constant 0 : i32
    return %arg0, %c0_i32, %c0_i32_0 : i32, i32, i32
  }
  func.func @transform_1(%arg0: i32) -> (i32, i32) {
    %c0_i32 = arith.constant 0 : i32
    %c0_i32_0 = arith.constant 0 : i32
    %c0_i32_1 = arith.constant 0 : i32
    return %c0_i32, %c0_i32_0 : i32, i32
  }
  func.func @transform_2(%arg0: i32) -> (i32, i32) {
    %c0_i32 = arith.constant 0 : i32
    %c0_i32_0 = arith.constant 0 : i32
    %c0_i32_1 = arith.constant 0 : i32
    return %c0_i32, %c0_i32_0 : i32, i32
  }
  func.func @transform_3(%arg0: i32) -> (i32, i32) {
    %c0_i32 = arith.constant 0 : i32
    %c0_i32_0 = arith.constant 0 : i32
    %c0_i32_1 = arith.constant 0 : i32
    return %c0_i32, %c0_i32_0 : i32, i32
  }
  func.func @transform_4(%arg0: i32) -> (i32, i32) {
    %c0_i32 = arith.constant 0 : i32
    %c0_i32_0 = arith.constant 0 : i32
    %c0_i32_1 = arith.constant 0 : i32
    return %c0_i32, %c0_i32_0 : i32, i32
  }
  func.func @transform_5(%arg0: i32) -> (i32, i32) {
    %c0_i32 = arith.constant 0 : i32
    %c0_i32_0 = arith.constant 0 : i32
    %c0_i32_1 = arith.constant 0 : i32
    return %c0_i32, %c0_i32_0 : i32, i32
  }
  func.func @transform_6(%arg0: i32) -> (i32, i32) {
    %c0_i32 = arith.constant 0 : i32
    %c0_i32_0 = arith.constant 0 : i32
    %c0_i32_1 = arith.constant 0 : i32
    return %c0_i32, %c0_i32_0 : i32, i32
  }
  func.func @transform_7(%arg0: i32) -> (i32, i32) {
    %c0_i32 = arith.constant 0 : i32
    %c0_i32_0 = arith.constant 0 : i32
    %c0_i32_1 = arith.constant 0 : i32
    return %c0_i32, %c0_i32_0 : i32, i32
  }
  func.func @transform_8(%arg0: i32) -> (i32, i32) {
    %c0_i32 = arith.constant 0 : i32
    %c0_i32_0 = arith.constant 0 : i32
    %c0_i32_1 = arith.constant 0 : i32
    return %c0_i32, %c0_i32_0 : i32, i32
  }
  func.func @transform_9(%arg0: i32) -> (i32, i32, i32) {
    %c0_i32 = arith.constant 0 : i32
    %c0_i32_0 = arith.constant 0 : i32
    %c0_i32_1 = arith.constant 0 : i32
    return %arg0, %c0_i32, %c0_i32_0 : i32, i32, i32
  }
}

</mosaic_0001>

<llo_original>
// kernel: tpu_custom_call.1
$region0: #{tpu_custom_call.1}
  #allocation0 [shape = 'u32[]', space=smem, size = 0x4, offset = 0x4, fixed_abs, tag = 'smem constant byte address 0x4 - core index']
  #allocation1 [shape = 'u32[144,128]{1,0:T(1,128)}', space=vmem, size = 0x12000, scoped, tag = 'internal scratch']
  %s0 = inlined_call_operand.vmem [shape: bf16[2,16,144], index: 0, kind: input, shape index: {}]
  %s1 = inlined_call_operand.vmem [shape: bf16[144,64], index: 1, kind: input, shape index: {}]
  %s2 = inlined_call_operand.vmem [shape: bf16[64,144], index: 2, kind: input, shape index: {}]
  %s3 = inlined_call_operand.vmem [shape: bf16[16,16], index: 3, kind: input, shape index: {}]
  %s4 = inlined_call_operand.vmem [shape: f32[16,1], index: 4, kind: input, shape index: {}]
  %s5 = inlined_call_operand.vmem [shape: f32[16,64], index: 5, kind: input, shape index: {}]
  %s6 = inlined_call_operand.vmem [shape: bf16[8,16], index: 6, kind: input, shape index: {}]
  %s7 = inlined_call_operand.vmem [shape: bf16[8,16], index: 7, kind: input, shape index: {}]
  %s8 = inlined_call_operand.vmem [shape: f32[8,1], index: 8, kind: input, shape index: {}]
  %s9 = inlined_call_operand.hbm [shape: f32[2,8,144], index: 9, kind: output, shape index: {}]
  %s10 = sld [smem:[#allocation0]]
  $region69: #{tpu_custom_call.1} parent=0
    _
  %s12 = ssub.s32 1, %s10
  %s13 = scalar_select 0, %s12, %s10
  $region1: #{tpu_custom_call.1} parent=0
    #allocation2 [shape = 'u8[16384]{0}', space=vmem, size = 0x4000, scoped, tag = 'output window, operand 0']
    #allocation3 [shape = 's32[2]{0}', space=sflag, size = 0x8, scoped, tag = 'scoped memory for tpu_custom_call.1']
    %14 = vsyncpa [#allocation3], 0
    %s15 = scalar_lea.sflag [#allocation3], 1
    %16 = vsyncpa %s15, 0
    loop: start=0, step=1, limit=4
    $region2: #{tpu_custom_call.1} parent=1 // loop_pre_header
      _
    $region3: #{tpu_custom_call.1} parent=1 // loop_header
      %s18 = sphi 0, %s22
      %p19 = scmp.ge.s32.totalorder %s18, 4
      %s28 = sphi 0, %s30
      %s31 = sphi 0, %s28
      %s32 = sphi 0, %s31
      %s48 = sphi 0, %s32
      %s52 = sphi 0, %s52
      %s54 = sphi 0, %s52
      %s55 = sphi 0, %s54
      %s69 = sphi 0, %s55
      %s73 = sphi 0, %s73
      %s75 = sphi 0, %s73
      %s76 = sphi 0, %s75
      %s90 = sphi 0, %s76
      %s94 = sphi 0, %s94
      %s96 = sphi 0, %s94
      %s97 = sphi 0, %s96
      %s111 = sphi 0, %s97
      %s115 = sphi 0, %s115
      %s117 = sphi 0, %s115
      %s118 = sphi 0, %s117
      %s132 = sphi 0, %s118
      %s136 = sphi 0, %s136
      %s138 = sphi 0, %s136
      %s139 = sphi 0, %s138
      %s153 = sphi 0, %s139
      %s157 = sphi 0, %s157
      %s159 = sphi 0, %s157
      %s160 = sphi 0, %s159
      %s174 = sphi 0, %s160
      %s178 = sphi 0, %s178
      %s180 = sphi 0, %s178
      %s181 = sphi 0, %s180
      %s195 = sphi 0, %s181
      %s199 = sphi 0, %s199
      %s201 = sphi 0, %s199
      %s202 = sphi 0, %s201
      %s216 = sphi 0, %s202
      %s222 = sphi 0, %s224
      %s225 = sphi 0, %s222
      %s226 = sphi 0, %s225
      %s242 = sphi 0, %s226
    $region4: #{tpu_custom_call.1} parent=1 // loop_header_branch
      %21 = sbr.rel (%p19) target = $region8
    $region5: #{tpu_custom_call.1} parent=1 // loop_body
      %s23 = ssub.s32 %s18, 1
      %s24 = ssub.s32 %s18, 2
      %s25 = sadd.s32 %s18, 1
      %s26 = ssub.s32 %s18, %s25
      %p27 = scmp.eq.s32.totalorder %s26, 0
      %s29 = sadd.s32 %s28, 1
      %s30 = scalar_select %p27, %s28, %s29
      %p33 = pneg %p27
      %p34 = scmp.eq.s32.totalorder %s18, 1
      %p35 = por %p33, %p34
      %p36 = scmp.ne.s32.totalorder %s28, %s31
      %p37 = scmp.eq.s32.totalorder %s18, 0
      %p38 = por %p36, %p37
      %p39 = scmp.ne.s32.totalorder %s28, %s31
      %p40 = scmp.eq.s32.totalorder %s23, 1
      %p41 = por %p39, %p40
      %p42 = scmp.ne.s32.totalorder %s31, %s32
      %p43 = scmp.eq.s32.totalorder %s23, 0
      %p44 = por %p42, %p43
      %p45 = scmp.ne.s32.totalorder %s31, %s32
      %p46 = scmp.eq.s32.totalorder %s24, 1
      %p47 = por %p45, %p46
      %p49 = scmp.ne.s32.totalorder %s32, %s48
      %p50 = scmp.eq.s32.totalorder %s24, 0
      %p51 = por %p49, %p50
      %s53 = sadd.s32 %s52, 1
      %p56 = scmp.eq.s32.totalorder %s18, 1
      %p57 = scmp.ne.s32.totalorder %s52, %s54
      %p58 = scmp.eq.s32.totalorder %s18, 0
      %p59 = por %p57, %p58
      %p60 = scmp.ne.s32.totalorder %s52, %s54
      %p61 = scmp.eq.s32.totalorder %s23, 1
      %p62 = por %p60, %p61
      %p63 = scmp.ne.s32.totalorder %s54, %s55
      %p64 = scmp.eq.s32.totalorder %s23, 0
      %p65 = por %p63, %p64
      %p66 = scmp.ne.s32.totalorder %s54, %s55
      %p67 = scmp.eq.s32.totalorder %s24, 1
      %p68 = por %p66, %p67
      %p70 = scmp.ne.s32.totalorder %s55, %s69
      %p71 = scmp.eq.s32.totalorder %s24, 0
      %p72 = por %p70, %p71
      %s74 = sadd.s32 %s73, 1
      %p77 = scmp.eq.s32.totalorder %s18, 1
      %p78 = scmp.ne.s32.totalorder %s73, %s75
      %p79 = scmp.eq.s32.totalorder %s18, 0
      %p80 = por %p78, %p79
      %p81 = scmp.ne.s32.totalorder %s73, %s75
      %p82 = scmp.eq.s32.totalorder %s23, 1
      %p83 = por %p81, %p82
      %p84 = scmp.ne.s32.totalorder %s75, %s76
      %p85 = scmp.eq.s32.totalorder %s23, 0
      %p86 = por %p84, %p85
      %p87 = scmp.ne.s32.totalorder %s75, %s76
      %p88 = scmp.eq.s32.totalorder %s24, 1
      %p89 = por %p87, %p88
      %p91 = scmp.ne.s32.totalorder %s76, %s90
      %p92 = scmp.eq.s32.totalorder %s24, 0
      %p93 = por %p91, %p92
      %s95 = sadd.s32 %s94, 1
      %p98 = scmp.eq.s32.totalorder %s18, 1
      %p99 = scmp.ne.s32.totalorder %s94, %s96
      %p100 = scmp.eq.s32.totalorder %s18, 0
      %p101 = por %p99, %p100
      %p102 = scmp.ne.s32.totalorder %s94, %s96
      %p103 = scmp.eq.s32.totalorder %s23, 1
      %p104 = por %p102, %p103
      %p105 = scmp.ne.s32.totalorder %s96, %s97
      %p106 = scmp.eq.s32.totalorder %s23, 0
      %p107 = por %p105, %p106
      %p108 = scmp.ne.s32.totalorder %s96, %s97
      %p109 = scmp.eq.s32.totalorder %s24, 1
      %p110 = por %p108, %p109
      %p112 = scmp.ne.s32.totalorder %s97, %s111
      %p113 = scmp.eq.s32.totalorder %s24, 0
      %p114 = por %p112, %p113
      %s116 = sadd.s32 %s115, 1
      %p119 = scmp.eq.s32.totalorder %s18, 1
      %p120 = scmp.ne.s32.totalorder %s115, %s117
      %p121 = scmp.eq.s32.totalorder %s18, 0
      %p122 = por %p120, %p121
      %p123 = scmp.ne.s32.totalorder %s115, %s117
      %p124 = scmp.eq.s32.totalorder %s23, 1
      %p125 = por %p123, %p124
      %p126 = scmp.ne.s32.totalorder %s117, %s118
      %p127 = scmp.eq.s32.totalorder %s23, 0
      %p128 = por %p126, %p127
      %p129 = scmp.ne.s32.totalorder %s117, %s118
      %p130 = scmp.eq.s32.totalorder %s24, 1
      %p131 = por %p129, %p130
      %p133 = scmp.ne.s32.totalorder %s118, %s132
      %p134 = scmp.eq.s32.totalorder %s24, 0
      %p135 = por %p133, %p134
      %s137 = sadd.s32 %s136, 1
      %p140 = scmp.eq.s32.totalorder %s18, 1
      %p141 = scmp.ne.s32.totalorder %s136, %s138
      %p142 = scmp.eq.s32.totalorder %s18, 0
      %p143 = por %p141, %p142
      %p144 = scmp.ne.s32.totalorder %s136, %s138
      %p145 = scmp.eq.s32.totalorder %s23, 1
      %p146 = por %p144, %p145
      %p147 = scmp.ne.s32.totalorder %s138, %s139
      %p148 = scmp.eq.s32.totalorder %s23, 0
      %p149 = por %p147, %p148
      %p150 = scmp.ne.s32.totalorder %s138, %s139
      %p151 = scmp.eq.s32.totalorder %s24, 1
      %p152 = por %p150, %p151
      %p154 = scmp.ne.s32.totalorder %s139, %s153
      %p155 = scmp.eq.s32.totalorder %s24, 0
      %p156 = por %p154, %p155
      %s158 = sadd.s32 %s157, 1
      %p161 = scmp.eq.s32.totalorder %s18, 1
      %p162 = scmp.ne.s32.totalorder %s157, %s159
      %p163 = scmp.eq.s32.totalorder %s18, 0
      %p164 = por %p162, %p163
      %p165 = scmp.ne.s32.totalorder %s157, %s159
      %p166 = scmp.eq.s32.totalorder %s23, 1
      %p167 = por %p165, %p166
      %p168 = scmp.ne.s32.totalorder %s159, %s160
      %p169 = scmp.eq.s32.totalorder %s23, 0
      %p170 = por %p168, %p169
      %p171 = scmp.ne.s32.totalorder %s159, %s160
      %p172 = scmp.eq.s32.totalorder %s24, 1
      %p173 = por %p171, %p172
      %p175 = scmp.ne.s32.totalorder %s160, %s174
      %p176 = scmp.eq.s32.totalorder %s24, 0
      %p177 = por %p175, %p176
      %s179 = sadd.s32 %s178, 1
      %p182 = scmp.eq.s32.totalorder %s18, 1
      %p183 = scmp.ne.s32.totalorder %s178, %s180
      %p184 = scmp.eq.s32.totalorder %s18, 0
      %p185 = por %p183, %p184
      %p186 = scmp.ne.s32.totalorder %s178, %s180
      %p187 = scmp.eq.s32.totalorder %s23, 1
      %p188 = por %p186, %p187
      %p189 = scmp.ne.s32.totalorder %s180, %s181
      %p190 = scmp.eq.s32.totalorder %s23, 0
      %p191 = por %p189, %p190
      %p192 = scmp.ne.s32.totalorder %s180, %s181
      %p193 = scmp.eq.s32.totalorder %s24, 1
      %p194 = por %p192, %p193
      %p196 = scmp.ne.s32.totalorder %s181, %s195
      %p197 = scmp.eq.s32.totalorder %s24, 0
      %p198 = por %p196, %p197
      %s200 = sadd.s32 %s199, 1
      %p203 = scmp.eq.s32.totalorder %s18, 1
      %p204 = scmp.ne.s32.totalorder %s199, %s201
      %p205 = scmp.eq.s32.totalorder %s18, 0
      %p206 = por %p204, %p205
      %p207 = scmp.ne.s32.totalorder %s199, %s201
      %p208 = scmp.eq.s32.totalorder %s23, 1
      %p209 = por %p207, %p208
      %p210 = scmp.ne.s32.totalorder %s201, %s202
      %p211 = scmp.eq.s32.totalorder %s23, 0
      %p212 = por %p210, %p211
      %p213 = scmp.ne.s32.totalorder %s201, %s202
      %p214 = scmp.eq.s32.totalorder %s24, 1
      %p215 = por %p213, %p214
      %p217 = scmp.ne.s32.totalorder %s202, %s216
      %p218 = scmp.eq.s32.totalorder %s24, 0
      %p219 = por %p217, %p218
      %s220 = ssub.s32 %s18, %s25
      %p221 = scmp.eq.s32.totalorder %s220, 0
      %s223 = sadd.s32 %s222, 1
      %s224 = scalar_select %p221, %s222, %s223
      %p227 = pneg %p221
      %p228 = scmp.eq.s32.totalorder %s18, 1
      %p229 = por %p227, %p228
      %p230 = scmp.ne.s32.totalorder %s222, %s225
      %p231 = scmp.eq.s32.totalorder %s18, 0
      %p232 = por %p230, %p231
      %p233 = scmp.ne.s32.totalorder %s222, %s225
      %p234 = scmp.eq.s32.totalorder %s23, 1
      %p235 = por %p233, %p234
      %p236 = scmp.ne.s32.totalorder %s225, %s226
      %p237 = scmp.eq.s32.totalorder %s23, 0
      %p238 = por %p236, %p237
      %p239 = scmp.ne.s32.totalorder %s225, %s226
      %p240 = scmp.eq.s32.totalorder %s24, 1
      %p241 = por %p239, %p240
      %p243 = scmp.ne.s32.totalorder %s226, %s242
      %p244 = scmp.eq.s32.totalorder %s24, 0
      %p245 = por %p243, %p244
      %p246 = scmp.le.s32.totalorder 1, %s18
      %p247 = scmp.lt.s32.totalorder %s18, 3
      %p248 = pnand %p246, %p247
      %p249 = pneg %p248
      // Predicated region
      $region9: #{tpu_custom_call.1} parent=5 // pred_check
        _
      $region10: #{tpu_custom_call.1} parent=5 // pred_check_branch
        %251 = sbr.rel (%p248) target = $region12
      $region11: #{tpu_custom_call.1} parent=5 // pred_region
        %s252 = ssub.s32 %s18, 1
        // Predicated region
        $region13: #{tpu_custom_call.1} parent=11 // pred_check
          %p253 = pneg %p65
        $region14: #{tpu_custom_call.1} parent=11 // pred_check_branch
          %255 = sbr.rel (%p253) target = $region16
        $region15: #{tpu_custom_call.1} parent=11 // pred_region
          _
        $region16: #{tpu_custom_call.1} parent=11 // pred_fallthru
          _
        // Predicated region
        $region17: #{tpu_custom_call.1} parent=11 // pred_check
          %p256 = pneg %p86
        $region18: #{tpu_custom_call.1} parent=11 // pred_check_branch
          %258 = sbr.rel (%p256) target = $region20
        $region19: #{tpu_custom_call.1} parent=11 // pred_region
          _
        $region20: #{tpu_custom_call.1} parent=11 // pred_fallthru
          _
        // Predicated region
        $region21: #{tpu_custom_call.1} parent=11 // pred_check
          %p259 = pneg %p107
        $region22: #{tpu_custom_call.1} parent=11 // pred_check_branch
          %261 = sbr.rel (%p259) target = $region24
        $region23: #{tpu_custom_call.1} parent=11 // pred_region
          _
        $region24: #{tpu_custom_call.1} parent=11 // pred_fallthru
          _
        // Predicated region
        $region25: #{tpu_custom_call.1} parent=11 // pred_check
          %p262 = pneg %p128
        $region26: #{tpu_custom_call.1} parent=11 // pred_check_branch
          %264 = sbr.rel (%p262) target = $region28
        $region27: #{tpu_custom_call.1} parent=11 // pred_region
          _
        $region28: #{tpu_custom_call.1} parent=11 // pred_fallthru
          _
        // Predicated region
        $region29: #{tpu_custom_call.1} parent=11 // pred_check
          %p265 = pneg %p149
        $region30: #{tpu_custom_call.1} parent=11 // pred_check_branch
          %267 = sbr.rel (%p265) target = $region32
        $region31: #{tpu_custom_call.1} parent=11 // pred_region
          _
        $region32: #{tpu_custom_call.1} parent=11 // pred_fallthru
          _
        // Predicated region
        $region33: #{tpu_custom_call.1} parent=11 // pred_check
          %p268 = pneg %p170
        $region34: #{tpu_custom_call.1} parent=11 // pred_check_branch
          %270 = sbr.rel (%p268) target = $region36
        $region35: #{tpu_custom_call.1} parent=11 // pred_region
          _
        $region36: #{tpu_custom_call.1} parent=11 // pred_fallthru
          _
        // Predicated region
        $region37: #{tpu_custom_call.1} parent=11 // pred_check
          %p271 = pneg %p191
        $region38: #{tpu_custom_call.1} parent=11 // pred_check_branch
          %273 = sbr.rel (%p271) target = $region40
        $region39: #{tpu_custom_call.1} parent=11 // pred_region
          _
        $region40: #{tpu_custom_call.1} parent=11 // pred_fallthru
          _
        // Predicated region
        $region41: #{tpu_custom_call.1} parent=11 // pred_check
          %p274 = pneg %p212
        $region42: #{tpu_custom_call.1} parent=11 // pred_check_branch
          %276 = sbr.rel (%p274) target = $region44
        $region43: #{tpu_custom_call.1} parent=11 // pred_region
          _
        $region44: #{tpu_custom_call.1} parent=11 // pred_fallthru
          _
      $region12: #{tpu_custom_call.1} parent=5 // pred_fallthru
        _
      %p277 = scmp.lt.s32.totalorder %s18, 2
      // Predicated region
      $region45: #{tpu_custom_call.1} parent=5 // pred_check
        %p278 = pneg %p277
      $region46: #{tpu_custom_call.1} parent=5 // pred_check_branch
        %280 = sbr.rel (%p278) target = $region48
      $region47: #{tpu_custom_call.1} parent=5 // pred_region
        // Predicated region
        $region49: #{tpu_custom_call.1} parent=47 // pred_check
          %p281 = pneg %p38
        $region50: #{tpu_custom_call.1} parent=47 // pred_check_branch
          %283 = sbr.rel (%p281) target = $region52
        $region51: #{tpu_custom_call.1} parent=47 // pred_region
          %p284 = scmp.lt.s32.totalorder %s18, 1
          %s285 = scalar_select %p284, %s18, 1
          %s286 = smul.addr %s285, 4
          %s287 = smul.addr %s286, 4
          %s288 = scalar_lea.vmem %s0, %s287
        $region52: #{tpu_custom_call.1} parent=47 // pred_fallthru
          _
      $region48: #{tpu_custom_call.1} parent=5 // pred_fallthru
        _
      %p289 = scmp.le.s32.totalorder 1, %s18
      %p290 = scmp.lt.s32.totalorder %s18, 3
      %p291 = pnand %p289, %p290
      %p292 = pneg %p291
      // Predicated region
      $region53: #{tpu_custom_call.1} parent=5 // pred_check
        _
      $region54: #{tpu_custom_call.1} parent=5 // pred_check_branch
        %294 = sbr.rel (%p291) target = $region56
      $region55: #{tpu_custom_call.1} parent=5 // pred_region
        %s295 = ssub.s32 %s18, 1
        %p296 = scmp.lt.s32.totalorder %s23, 1
        %s297 = scalar_select %p296, %s23, 1
        %s298 = smul.addr %s297, 4
        %s299 = smul.addr %s298, 4
        %s300 = scalar_lea.vmem %s0, %s299
        %p301 = pneg %p44
        %p302 = pneg %p41
        %p303 = pneg %p65
        %p304 = pneg %p62
        %p305 = pneg %p86
        %p306 = pneg %p83
        %p307 = pneg %p107
        %p308 = pneg %p104
        %p309 = pneg %p128
        %p310 = pneg %p125
        %p311 = pneg %p149
        %p312 = pneg %p146
        %p313 = pneg %p170
        %p314 = pneg %p167
        %p315 = pneg %p191
        %p316 = pneg %p188
        %p317 = pneg %p212
        %p318 = pneg %p209
        %p319 = pneg %p238
        %p320 = pneg %p235
        %s321 = sand.u32 %s225, 1
        %s322 = scalar_lea.sflag [#allocation3], %s321
        %s323 = sand.u32 %s225, 1
        %s324 = smul.addr %s323, 16
        %s325 = scalar_lea.vmem [#allocation2], %s324
        %p326 = scmp.lt.s32.totalorder %s23, 1
        %s327 = scalar_select %p326, %s23, 1
        %s328 = smul.addr %s327, 4
        %s329 = smul.addr %s328, 4
        %s330 = scalar_lea.vmem %s0, %s329
        %v332 = vld [vmem:[%s330] sm:$0xff]
        %v333 = vld [vmem:[%s330 + $0x8] sm:$0xff]
        %v334 = vld [vmem:[%s1] sm:$0xf]
        %v335 = vld [vmem:[%s1 + $0x4] sm:$0xf]
        %v336 = vld [vmem:[%s1 + $0x8] sm:$0xf]
        %v337 = vld [vmem:[%s1 + $0xc] sm:$0xf]
        %v338 = vld [vmem:[%s1 + $0x10] sm:$0xf]
        %v339 = vld [vmem:[%s1 + $0x14] sm:$0xf]
        %v340 = vld [vmem:[%s1 + $0x18] sm:$0xf]
        %v341 = vld [vmem:[%s1 + $0x1c] sm:$0xf]
        %v342 = vld [vmem:[%s1 + $0x20] sm:$0xf]
        %v343 = vld [vmem:[%s1 + $0x24] sm:$0xf]
        %v344 = vld [vmem:[%s1 + $0x28] sm:$0xf]
        %v345 = vld [vmem:[%s1 + $0x2c] sm:$0xf]
        %v346 = vld [vmem:[%s1 + $0x30] sm:$0xf]
        %v347 = vld [vmem:[%s1 + $0x34] sm:$0xf]
        %v348 = vld [vmem:[%s1 + $0x38] sm:$0xf]
        %v349 = vld [vmem:[%s1 + $0x3c] sm:$0xf]
        %v350 = vld [vmem:[%s1 + $0x40] sm:$0xf]
        %v351 = vld [vmem:[%s1 + $0x44] sm:$0xf]
        %v354 = vunpack.c.l.b16 %v332
        %v355 = vunpack.c.h.b16 %v332
        %v356 = vunpack.c.l.b16 %v333
        %v357 = vunpack.c.h.b16 %v333
        %v358 = vpack.c.b16 %v356, %v354
        %v359 = vpack.c.b16 %v357, %v355
        %v379 = vunpack.c.l.b16 %v334
        %v380 = vunpack.c.l.b16 %v335
        %v381 = vunpack.c.l.b16 %v336
        %v382 = vunpack.c.l.b16 %v337
        %v383 = vunpack.c.l.b16 %v338
        %v384 = vunpack.c.l.b16 %v339
        %v385 = vunpack.c.l.b16 %v340
        %v386 = vunpack.c.l.b16 %v341
        %v387 = vunpack.c.l.b16 %v342
        %v388 = vunpack.c.l.b16 %v343
        %v389 = vunpack.c.l.b16 %v344
        %v390 = vunpack.c.l.b16 %v345
        %v391 = vunpack.c.l.b16 %v346
        %v392 = vunpack.c.l.b16 %v347
        %v393 = vunpack.c.l.b16 %v348
        %v394 = vunpack.c.l.b16 %v349
        %v395 = vunpack.c.l.b16 %v350
        %v396 = vunpack.c.l.b16 %v351
        %v397 = vpack.c.b16 %v380, %v379
        %v398 = vpack.c.b16 %v382, %v381
        %v399 = vpack.c.b16 %v384, %v383
        %v400 = vpack.c.b16 %v386, %v385
        %v401 = vpack.c.b16 %v388, %v387
        %v402 = vpack.c.b16 %v390, %v389
        %v403 = vpack.c.b16 %v392, %v391
        %v404 = vpack.c.b16 %v394, %v393
        %v405 = vpack.c.b16 %v396, %v395
        %vm415 = vcmask 130048
        %v417 = vsel %vm415, %v359, 0
        %419 = vmatprep.subr.bf16.mxu0 0
        %420 = vmatpush1.bf16.msra.mxu0 %v397
        %421 = vmatprep.subr.bf16.mxu0 0
        %422 = vmatpush1.bf16.msra.mxu0 %v398
        %423 = vmatprep.subr.bf16.mxu0 0
        %424 = vmatpush1.bf16.msra.mxu0 %v399
        %425 = vmatprep.subr.bf16.mxu0 0
        %426 = vmatpush1.bf16.msra.mxu0 %v400
        %427 = vmatprep.subr.bf16.mxu0 0
        %428 = vmatpush1.bf16.msra.mxu0 %v401
        %429 = vmatprep.subr.bf16.mxu0 0
        %430 = vmatpush1.bf16.msra.mxu0 %v402
        %431 = vmatprep.subr.bf16.mxu0 0
        %432 = vmatpush1.bf16.msra.mxu0 %v403
        %433 = vmatprep.subr.bf16.mxu0 0
        %434 = vmatpush1.bf16.msra.mxu0 %v404
        %435 = vmatprep.subr.bf16.mxu0 0
        %436 = vmatpush1.bf16.msra.mxu0 %v405
        %437 = vmatprep.subr.bf16.mxu0 0
        %438 = vmatpush1.bf16.msra.mxu0 0
        %439 = vmatprep.subr.bf16.mxu0 0
        %440 = vmatpush1.bf16.msra.mxu0 0
        %441 = vmatprep.subr.bf16.mxu0 0
        %442 = vmatpush1.bf16.msra.mxu0 0
        %443 = vmatprep.subr.bf16.mxu0 0
        %444 = vmatpush1.bf16.msra.mxu0 0
        %445 = vmatprep.subr.bf16.mxu0 0
        %446 = vmatpush1.bf16.msra.mxu0 0
        %447 = vmatprep.subr.bf16.mxu0 0
        %448 = vmatpush1.bf16.msra.mxu0 0
        %449 = vmatprep.subr.bf16.mxu0 0
        %450 = vmatpush1.bf16.msra.mxu0 0
        %451 = vmatprep.mubr.bf16.mxu0 %v417
        %452 = vmatmul.mubr.bf16.gmra.mrb[0].mxu0 %v358
        %v453 = vpop.f32.mrb[0].mxu0
        %v454 = vadd.f32 0.0, %v453
        %v455 = vpop.f32.mrb[0].mxu0
        %v456 = vpop.f32.mrb[0].mxu0
        %v457 = vadd.f32 0.0, %v456
        %v458 = vpop.f32.mrb[0].mxu0
        %459 = vdwg.mxu0
        %v460 = vld [vmem:[%s3] sm:$0xf]
        %v461 = vld [vmem:[%s3 + $0x4] sm:$0xf]
        %v462 = vpack.c.bf16 %v457, %v454
        %v463 = vld [vmem:[%s4] sm:$0xff]
        %v464 = vld [vmem:[%s4 + $0x8] sm:$0xff]
        %466 = vset.pattern.permute.xlu0 0
        %467 = vperm.xlu0 %466, %v463
        %v468 = vpop.permute.xlu0 %467
        %471 = vset.pattern.permute.xlu0 0
        %472 = vperm.xlu0 %471, %v464
        %v473 = vpop.permute.xlu0 %472
        %v477 = vunpack.c.l.b16 %v460
        %v478 = vunpack.c.l.b16 %v461
        %v479 = vpack.c.b16 %v478, %v477
        %v481 = vsel %vm415, %v479, 0
        %483 = vmatprep.subr.bf16.mxu0 0
        %484 = vmatpush1.bf16.msra.mxu0 %v462
        %485 = vmatprep.subr.bf16.mxu0 0
        %486 = vmatpush1.bf16.msra.mxu0 0
        %487 = vmatprep.subr.bf16.mxu0 0
        %488 = vmatpush1.bf16.msra.mxu0 0
        %489 = vmatprep.subr.bf16.mxu0 0
        %490 = vmatpush1.bf16.msra.mxu0 0
        %491 = vmatprep.subr.bf16.mxu0 0
        %492 = vmatpush1.bf16.msra.mxu0 0
        %493 = vmatprep.subr.bf16.mxu0 0
        %494 = vmatpush1.bf16.msra.mxu0 0
        %495 = vmatprep.subr.bf16.mxu0 0
        %496 = vmatpush1.bf16.msra.mxu0 0
        %497 = vmatprep.subr.bf16.mxu0 0
        %498 = vmatpush1.bf16.msra.mxu0 0
        %499 = vmatprep.subr.bf16.mxu0 0
        %500 = vmatpush1.bf16.msra.mxu0 0
        %501 = vmatprep.subr.bf16.mxu0 0
        %502 = vmatpush1.bf16.msra.mxu0 0
        %503 = vmatprep.subr.bf16.mxu0 0
        %504 = vmatpush1.bf16.msra.mxu0 0
        %505 = vmatprep.subr.bf16.mxu0 0
        %506 = vmatpush1.bf16.msra.mxu0 0
        %507 = vmatprep.subr.bf16.mxu0 0
        %508 = vmatpush1.bf16.msra.mxu0 0
        %509 = vmatprep.subr.bf16.mxu0 0
        %510 = vmatpush1.bf16.msra.mxu0 0
        %511 = vmatprep.subr.bf16.mxu0 0
        %512 = vmatpush1.bf16.msra.mxu0 0
        %513 = vmatprep.subr.bf16.mxu0 0
        %514 = vmatpush1.bf16.msra.mxu0 0
        %515 = vmatprep.mubr.bf16.mxu0 0
        %516 = vmatmul.mubr.bf16.gmra.mrb[0].mxu0 %v481
        %v517 = vpop.f32.mrb[0].mxu0
        %v518 = vadd.f32 %v468, %v517
        %v519 = vpop.f32.mrb[0].mxu0
        %v520 = vpop.f32.mrb[0].mxu0
        %v521 = vadd.f32 %v473, %v520
        %v522 = vpop.f32.mrb[0].mxu0
        %523 = vdwg.mxu0
        %v524 = vmax.f32 %v518, 0.0
        %v525 = vmax.f32 %v521, 0.0
        %v526 = vld [vmem:[%s5] sm:$0xff]
        %v527 = vld [vmem:[%s5 + $0x8] sm:$0xff]
        %v528 = vmul.f32 %v524, %v526
        %v529 = vmul.f32 %v525, %v527
        %v530 = vld [vmem:[%s6] sm:$0xf]
        %v531 = vpack.c.bf16 %v529, %v528
        %v533 = vsel %vm415, %v530, 0
        %535 = vmatprep.subr.bf16.mxu0 0
        %536 = vmatpush1.bf16.msra.mxu0 %v531
        %537 = vmatprep.subr.bf16.mxu0 0
        %538 = vmatpush1.bf16.msra.mxu0 0
        %539 = vmatprep.subr.bf16.mxu0 0
        %540 = vmatpush1.bf16.msra.mxu0 0
        %541 = vmatprep.subr.bf16.mxu0 0
        %542 = vmatpush1.bf16.msra.mxu0 0
        %543 = vmatprep.subr.bf16.mxu0 0
        %544 = vmatpush1.bf16.msra.mxu0 0
        %545 = vmatprep.subr.bf16.mxu0 0
        %546 = vmatpush1.bf16.msra.mxu0 0
        %547 = vmatprep.subr.bf16.mxu0 0
        %548 = vmatpush1.bf16.msra.mxu0 0
        %549 = vmatprep.subr.bf16.mxu0 0
        %550 = vmatpush1.bf16.msra.mxu0 0
        %551 = vmatprep.subr.bf16.mxu0 0
        %552 = vmatpush1.bf16.msra.mxu0 0
        %553 = vmatprep.subr.bf16.mxu0 0
        %554 = vmatpush1.bf16.msra.mxu0 0
        %555 = vmatprep.subr.bf16.mxu0 0
        %556 = vmatpush1.bf16.msra.mxu0 0
        %557 = vmatprep.subr.bf16.mxu0 0
        %558 = vmatpush1.bf16.msra.mxu0 0
        %559 = vmatprep.subr.bf16.mxu0 0
        %560 = vmatpush1.bf16.msra.mxu0 0
        %561 = vmatprep.subr.bf16.mxu0 0
        %562 = vmatpush1.bf16.msra.mxu0 0
        %563 = vmatprep.subr.bf16.mxu0 0
        %564 = vmatpush1.bf16.msra.mxu0 0
        %565 = vmatprep.subr.bf16.mxu0 0
        %566 = vmatpush1.bf16.msra.mxu0 0
        %567 = vmatprep.mubr.bf16.mxu0 0
        %568 = vmatmul.mubr.bf16.gmra.mrb[0].mxu0 %v533
        %v569 = vpop.f32.mrb[0].mxu0
        %v570 = vadd.f32 0.0, %v569
        %v571 = vpop.f32.mrb[0].mxu0
        %v572 = vpop.f32.mrb[0].mxu0
        %v573 = vpop.f32.mrb[0].mxu0
        %574 = vdwg.mxu0
        %v575 = vld [vmem:[%s7] sm:$0xf]
        %v576 = vpack.c.bf16 %v570, %v570
        %v577 = vld [vmem:[%s2] sm:$0xff]
        %v578 = vld [vmem:[%s2 + $0x8] sm:$0xff]
        %v579 = vld [vmem:[%s2 + $0x10] sm:$0xff]
        %v580 = vld [vmem:[%s2 + $0x18] sm:$0xff]
        %v581 = vld [vmem:[%s2 + $0x20] sm:$0xff]
        %v582 = vld [vmem:[%s2 + $0x28] sm:$0xff]
        %v583 = vld [vmem:[%s2 + $0x30] sm:$0xff]
        %v584 = vld [vmem:[%s2 + $0x38] sm:$0xff]
        %v593 = vunpack.c.l.b16 %v577
        %v594 = vunpack.c.h.b16 %v577
        %v595 = vunpack.c.l.b16 %v578
        %v596 = vunpack.c.h.b16 %v578
        %v597 = vunpack.c.l.b16 %v579
        %v598 = vunpack.c.h.b16 %v579
        %v599 = vunpack.c.l.b16 %v580
        %v600 = vunpack.c.h.b16 %v580
        %v601 = vunpack.c.l.b16 %v581
        %v602 = vunpack.c.h.b16 %v581
        %v603 = vunpack.c.l.b16 %v582
        %v604 = vunpack.c.h.b16 %v582
        %v605 = vunpack.c.l.b16 %v583
        %v606 = vunpack.c.h.b16 %v583
        %v607 = vunpack.c.l.b16 %v584
        %v608 = vunpack.c.h.b16 %v584
        %v609 = vpack.c.b16 %v595, %v593
        %v610 = vpack.c.b16 %v596, %v594
        %v611 = vpack.c.b16 %v599, %v597
        %v612 = vpack.c.b16 %v600, %v598
        %v613 = vpack.c.b16 %v603, %v601
        %v614 = vpack.c.b16 %v604, %v602
        %v615 = vpack.c.b16 %v607, %v605
        %v616 = vpack.c.b16 %v608, %v606
        %vm625 = vcmask 523264
        %v627 = vsel %vm625, %v576, 0
        %629 = vmatprep.subr.bf16.mxu0 %v610
        %630 = vmatpush1.bf16.msra.mxu0 %v609
        %631 = vmatprep.subr.bf16.mxu0 %v612
        %632 = vmatpush1.bf16.msra.mxu0 %v611
        %633 = vmatprep.subr.bf16.mxu0 %v614
        %634 = vmatpush1.bf16.msra.mxu0 %v613
        %635 = vmatprep.subr.bf16.mxu0 %v616
        %636 = vmatpush1.bf16.msra.mxu0 %v615
        %637 = vmatprep.subr.bf16.mxu0 0
        %638 = vmatpush1.bf16.msra.mxu0 0
        %639 = vmatprep.subr.bf16.mxu0 0
        %640 = vmatpush1.bf16.msra.mxu0 0
        %641 = vmatprep.subr.bf16.mxu0 0
        %642 = vmatpush1.bf16.msra.mxu0 0
        %643 = vmatprep.subr.bf16.mxu0 0
        %644 = vmatpush1.bf16.msra.mxu0 0
        %645 = vmatprep.subr.bf16.mxu0 0
        %646 = vmatpush1.bf16.msra.mxu0 0
        %647 = vmatprep.subr.bf16.mxu0 0
        %648 = vmatpush1.bf16.msra.mxu0 0
        %649 = vmatprep.subr.bf16.mxu0 0
        %650 = vmatpush1.bf16.msra.mxu0 0
        %651 = vmatprep.subr.bf16.mxu0 0
        %652 = vmatpush1.bf16.msra.mxu0 0
        %653 = vmatprep.subr.bf16.mxu0 0
        %654 = vmatpush1.bf16.msra.mxu0 0
        %655 = vmatprep.subr.bf16.mxu0 0
        %656 = vmatpush1.bf16.msra.mxu0 0
        %657 = vmatprep.subr.bf16.mxu0 0
        %658 = vmatpush1.bf16.msra.mxu0 0
        %659 = vmatprep.subr.bf16.mxu0 0
        %660 = vmatpush1.bf16.msra.mxu0 0
        %661 = vmatprep.mubr.bf16.mxu0 0
        %662 = vmatmul.mubr.bf16.gmra.mrb[0].mxu0 %v627
        %v663 = vpop.f32.mrb[0].mxu0
        %v664 = vadd.f32 0.0, %v663
        %v665 = vpop.f32.mrb[0].mxu0
        %v666 = vadd.f32 0.0, %v665
        %v667 = vpop.f32.mrb[0].mxu0
        %v668 = vpop.f32.mrb[0].mxu0
        %669 = vdwg.mxu0
        %v672 = vsel %vm415, %v575, 0
        %674 = vmatprep.subr.bf16.mxu0 %v359
        %675 = vmatpush1.bf16.msra.mxu0 %v358
        %676 = vmatprep.subr.bf16.mxu0 0
        %677 = vmatpush1.bf16.msra.mxu0 0
        %678 = vmatprep.subr.bf16.mxu0 0
        %679 = vmatpush1.bf16.msra.mxu0 0
        %680 = vmatprep.subr.bf16.mxu0 0
        %681 = vmatpush1.bf16.msra.mxu0 0
        %682 = vmatprep.subr.bf16.mxu0 0
        %683 = vmatpush1.bf16.msra.mxu0 0
        %684 = vmatprep.subr.bf16.mxu0 0
        %685 = vmatpush1.bf16.msra.mxu0 0
        %686 = vmatprep.subr.bf16.mxu0 0
        %687 = vmatpush1.bf16.msra.mxu0 0
        %688 = vmatprep.subr.bf16.mxu0 0
        %689 = vmatpush1.bf16.msra.mxu0 0
        %690 = vmatprep.subr.bf16.mxu0 0
        %691 = vmatpush1.bf16.msra.mxu0 0
        %692 = vmatprep.subr.bf16.mxu0 0
        %693 = vmatpush1.bf16.msra.mxu0 0
        %694 = vmatprep.subr.bf16.mxu0 0
        %695 = vmatpush1.bf16.msra.mxu0 0
        %696 = vmatprep.subr.bf16.mxu0 0
        %697 = vmatpush1.bf16.msra.mxu0 0
        %698 = vmatprep.subr.bf16.mxu0 0
        %699 = vmatpush1.bf16.msra.mxu0 0
        %700 = vmatprep.subr.bf16.mxu0 0
        %701 = vmatpush1.bf16.msra.mxu0 0
        %702 = vmatprep.subr.bf16.mxu0 0
        %703 = vmatpush1.bf16.msra.mxu0 0
        %704 = vmatprep.subr.bf16.mxu0 0
        %705 = vmatpush1.bf16.msra.mxu0 0
        %706 = vmatprep.mubr.bf16.mxu0 0
        %707 = vmatmul.mubr.bf16.gmra.mrb[0].mxu0 %v672
        %v708 = vpop.f32.mrb[0].mxu0
        %v709 = vadd.f32 %v664, %v708
        %v710 = vpop.f32.mrb[0].mxu0
        %v711 = vadd.f32 %v666, %v710
        %v712 = vpop.f32.mrb[0].mxu0
        %v713 = vpop.f32.mrb[0].mxu0
        %714 = vdwg.mxu0
        %v715 = vld [vmem:[%s8] sm:$0xff]
        %717 = vset.pattern.permute.xlu0 0
        %718 = vperm.xlu0 %717, %v715
        %v719 = vpop.permute.xlu0 %718
        %v721 = vadd.f32 %v709, %v719
        %v722 = vadd.f32 %v711, %v719
        %v723 = vmax.f32 %v721, 0.0
        %v724 = vmax.f32 %v722, 0.0
        %725 = vst [vmem:[%s325] sm:$0xff] %v723
        %726 = vst.msk [vmem:[%s325 + $0x8] sm:$0xff] %vm415, %v724
        %s727 = sand.u32 %s225, 1
        %s728 = scalar_lea.sflag [#allocation3], %s727
        %s729 = sand.u32 %s225, 1
        %s730 = smul.addr %s729, 16
        %s731 = scalar_lea.vmem [#allocation2], %s730
        // Predicated region
        $region57: #{tpu_custom_call.1} parent=55 // pred_check
          %p732 = pneg %p235
        $region58: #{tpu_custom_call.1} parent=55 // pred_check_branch
          %734 = sbr.rel (%p732) target = $region60
        $region59: #{tpu_custom_call.1} parent=55 // pred_region
          %s736 = ssub.s32 256, 256
          %737 = vsyncadd %s728, %s736
          %s738 = smul.addr %s23, 2
          %s739 = smul.addr %s738, 128
          %s740 = scalar_lea.hbm %s9, %s739
          %s742 = sshll.u32 %s731, 4
          %s743 = int_to_ptr.vmem [resolvable:$true] %s742
          %745 = dma.vmem_to_hbm [thread:$0]  %s743, 256, %s740, %s728
        $region60: #{tpu_custom_call.1} parent=55 // pred_fallthru
          _
      $region56: #{tpu_custom_call.1} parent=5 // pred_fallthru
        _
      %p746 = scmp.le.s32.totalorder 2, %s18
      // Predicated region
      $region61: #{tpu_custom_call.1} parent=5 // pred_check
        %p747 = pneg %p746
      $region62: #{tpu_custom_call.1} parent=5 // pred_check_branch
        %749 = sbr.rel (%p747) target = $region64
      $region63: #{tpu_custom_call.1} parent=5 // pred_region
        %s750 = ssub.s32 %s18, 2
        // Predicated region
        $region65: #{tpu_custom_call.1} parent=63 // pred_check
          %p751 = pneg %p241
        $region66: #{tpu_custom_call.1} parent=63 // pred_check_branch
          %753 = sbr.rel (%p751) target = $region68
        $region67: #{tpu_custom_call.1} parent=63 // pred_region
          %s754 = sand.u32 %s226, 1
          %s755 = scalar_lea.sflag [#allocation3], %s754
          %s756 = sand.u32 %s226, 1
          %s757 = smul.addr %s756, 16
          %s758 = scalar_lea.vmem [#allocation2], %s757
          %759 = dma.done %s755, 256
        $region68: #{tpu_custom_call.1} parent=63 // pred_fallthru
          _
      $region64: #{tpu_custom_call.1} parent=5 // pred_fallthru
        _
    $region6: #{tpu_custom_call.1} parent=1 // loop_footer
      %s22 = sadd.s32 1, %s18
    $region7: #{tpu_custom_call.1} parent=1 // loop_footer_branch
      %17 = sbr.rel target = $region3
    $region8: #{tpu_custom_call.1} parent=1 // loop_exit
      _
    %760 = vsyncpa [#allocation3], 1
    %s761 = scalar_lea.sflag [#allocation3], 1
    %762 = vsyncpa %s761, 1

</llo_original>
